<compile_context>
chip_gen: v7x
topology: tpu7x:2x2x1
jax: 0.10.0
libtpu: 0.0.40
codegen_flags: <defaults>
</compile_context>

<pallas_src>
import functools

import jax
import jax.numpy as jnp
from jax.experimental import pallas as pl
from jax.experimental.pallas import tpu as pltpu


# -----------------------------------------------------------------------------
# Kernels
# -----------------------------------------------------------------------------
def _noisy_linear_train_kernel(x_ref, wmu_ref, wsig_ref, eps_in_ref,
                               eps_out_ref, bias_ref, o_ref):
    """Two-dot factored-noise form; accumulates f32 directly into o_ref."""
    k = pl.program_id(2)

    @pl.when(k == 0)
    def _init():
        # Fold the (already mu+sigma*eps) bias in at the first K step.
        o_ref[...] = jnp.broadcast_to(bias_ref[...], o_ref.shape).astype(o_ref.dtype)

    x = x_ref[...]                                   # (tm, tk) compute_dtype
    xs = x * eps_in_ref[...]                         # eps_in row (1, tk) bcast
    mu_part = jnp.dot(x, wmu_ref[...], preferred_element_type=jnp.float32)
    sig_part = jnp.dot(xs, wsig_ref[...], preferred_element_type=jnp.float32)
    # eps_out kept f32 so it scales the f32 partial sums.
    o_ref[...] += mu_part + eps_out_ref[...] * sig_part


def _noisy_linear_eval_kernel(x_ref, wmu_ref, bias_ref, o_ref):
    k = pl.program_id(2)

    @pl.when(k == 0)
    def _init():
        o_ref[...] = jnp.broadcast_to(bias_ref[...], o_ref.shape).astype(o_ref.dtype)

    o_ref[...] += jnp.dot(x_ref[...], wmu_ref[...],
                          preferred_element_type=jnp.float32)


# -----------------------------------------------------------------------------
# Tiling plan (static, Python-side)
# -----------------------------------------------------------------------------
def _round_up(x, m):
    return (x + m - 1) // m * m


def _pick_tile(dim, unit, cap):
    """Largest multiple of `unit` <= cap that tiles round_up(dim, unit) with
    minimal padding slack (up to ~6% extra allowed to prefer bigger tiles)."""
    dim_r = _round_up(max(dim, 1), unit)
    hi = min(max(cap, unit), dim_r)
    candidates = list(range(unit, hi + 1, unit))
    padded = {t: _round_up(dim_r, t) for t in candidates}
    best = min(padded.values())
    tol = max(unit, best // 16)
    ok = [t for t in candidates if padded[t] <= best + tol]
    return max(ok)


def make_plan(batch, in_features, out_features, *,
              tm_cap=256, tn_cap=512, tk_cap=1024):
    tm = _pick_tile(batch, 8, tm_cap)
    tk = _pick_tile(in_features, 128, tk_cap)
    tn = _pick_tile(out_features, 128, tn_cap)
    Mp = _round_up(max(batch, 1), tm)
    Kp = _round_up(in_features, tk)
    Np = _round_up(out_features, tn)

    # v7x has 2 TensorCores sharing the parallel grid axes: guarantee >= 2
    # parallel tiles when the problem permits (neutral on 1-TC v5e/v6e).
    if (Mp // tm) * (Np // tn) == 1:
        if Np >= 2 * 128:
            tn = _pick_tile(out_features, 128, Np // 2)
            Np = _round_up(out_features, tn)
        elif Mp >= 16:
            tm = _pick_tile(batch, 8, Mp // 2)
            Mp = _round_up(max(batch, 1), tm)

    grid = (Mp // tm, Np // tn, Kp // tk)   # reduction axis (K) last
    return dict(batch=batch, in_features=in_features, out_features=out_features,
                tm=tm, tn=tn, tk=tk, Mp=Mp, Np=Np, Kp=Kp, grid=grid)


# -----------------------------------------------------------------------------
# One-time parameter prep (hoisted OUT of the per-step forward)
# -----------------------------------------------------------------------------
def _pad2(a, target_shape):
    pads = [(0, t - s) for s, t in zip(a.shape, target_shape)]
    if all(p == (0, 0) for p in pads):
        return a
    return jnp.pad(a, pads)


def prepare_noisy_linear(weight_mu, weight_sigma, eps_in, eps_out,
                         bias_mu, bias_sigma, bias_epsilon, plan, *,
                         compute_dtype=jnp.bfloat16):
    """Transpose to (in, out), pad to (Kp, Np), cast MXU operands, fold bias.

    Call once per parameter update / noise reset -- NOT per forward step --
    so no HBM->HBM transpose+pad copies land on the training-step hot path.
    """
    Kp, Np = plan["Kp"], plan["Np"]
    out_f, in_f = weight_mu.shape
    wmu_t = _pad2(weight_mu.T, (Kp, Np)).astype(compute_dtype)
    wsig_t = _pad2(weight_sigma.T, (Kp, Np)).astype(compute_dtype)
    eps_in_r = _pad2(eps_in.reshape(1, in_f), (1, Kp)).astype(compute_dtype)
    # eps_out stays f32: it scales the f32 sigma partial sums in the kernel.
    eps_out_r = _pad2(eps_out.reshape(1, out_f), (1, Np)).astype(jnp.float32)
    bias_train = _pad2((bias_mu + bias_sigma * bias_epsilon).reshape(1, out_f),
                       (1, Np)).astype(jnp.float32)
    bias_eval = _pad2(bias_mu.reshape(1, out_f), (1, Np)).astype(jnp.float32)
    return dict(wmu_t=wmu_t, wsig_t=wsig_t, eps_in=eps_in_r, eps_out=eps_out_r,
                bias_train=bias_train, bias_eval=bias_eval)


# -----------------------------------------------------------------------------
# Forward
# -----------------------------------------------------------------------------
def noisy_linear_fwd(x, prepared, plan, *, training=True):
    """Pallas-backed NoisyLinear forward. x: (batch, in_features) f32."""
    batch = x.shape[0]
    in_f, out_f = plan["in_features"], plan["out_features"]
    tm, tn, tk = plan["tm"], plan["tn"], plan["tk"]
    Mp, Np, Kp = plan["Mp"], plan["Np"], plan["Kp"]
    grid = plan["grid"]

    compute_dtype = prepared["wmu_t"].dtype
    xp = _pad2(x, (Mp, Kp)).astype(compute_dtype)

    # Scoped-VMEM budget (double-buffered inputs + resident f32 output).
    wbytes = jnp.dtype(compute_dtype).itemsize
    vmem_est = (2 * tm * tk * wbytes            # x
                + 2 * 2 * tk * tn * wbytes      # wmu, wsig
                + 2 * tm * tn * 4               # output tile
                + 4 * (tk + 3 * tn) * 4)        # eps/bias rows
    cp_kwargs = dict(dimension_semantics=("parallel", "parallel", "arbitrary"))
    if vmem_est > 12 * 1024 * 1024:             # headroom under v5e's 16 MiB default
        cp_kwargs["vmem_limit_bytes"] = min(int(vmem_est * 3 // 2), 32 * 1024 * 1024)
    compiler_params = pltpu.CompilerParams(**cp_kwargs)

    if training:
        out_p = pl.pallas_call(
            _noisy_linear_train_kernel,
            out_shape=jax.ShapeDtypeStruct((Mp, Np), jnp.float32),
            grid_spec=pltpu.PrefetchScalarGridSpec(
                num_scalar_prefetch=0, grid=grid,
                in_specs=[
                    pl.BlockSpec((tm, tk), lambda i, j, k: (i, k)),   # x
                    pl.BlockSpec((tk, tn), lambda i, j, k: (k, j)),   # weight_mu^T
                    pl.BlockSpec((tk, tn), lambda i, j, k: (k, j)),   # weight_sigma^T
                    pl.BlockSpec((1, tk), lambda i, j, k: (0, k)),    # eps_in row
                    pl.BlockSpec((1, tn), lambda i, j, k: (0, j)),    # eps_out row
                    pl.BlockSpec((1, tn), lambda i, j, k: (0, j)),    # folded bias
                ],
                out_specs=pl.BlockSpec((tm, tn), lambda i, j, k: (i, j))),
            compiler_params=compiler_params,
        )(xp, prepared["wmu_t"], prepared["wsig_t"], prepared["eps_in"],
          prepared["eps_out"], prepared["bias_train"])
    else:
        out_p = pl.pallas_call(
            _noisy_linear_eval_kernel,
            out_shape=jax.ShapeDtypeStruct((Mp, Np), jnp.float32),
            grid_spec=pltpu.PrefetchScalarGridSpec(
                num_scalar_prefetch=0, grid=grid,
                in_specs=[
                    pl.BlockSpec((tm, tk), lambda i, j, k: (i, k)),   # x
                    pl.BlockSpec((tk, tn), lambda i, j, k: (k, j)),   # weight_mu^T
                    pl.BlockSpec((1, tn), lambda i, j, k: (0, j)),    # bias_mu
                ],
                out_specs=pl.BlockSpec((tm, tn), lambda i, j, k: (i, j))),
            compiler_params=compiler_params,
        )(xp, prepared["wmu_t"], prepared["bias_eval"])

    return out_p[:batch, :out_f]


# -----------------------------------------------------------------------------
# Deterministic parameter / noise initialization (mirrors the PyTorch module)
# -----------------------------------------------------------------------------
def _scale_noise(key, size):
    x = jax.random.normal(key, (size,), dtype=jnp.float32)
    return jnp.sign(x) * jnp.sqrt(jnp.abs(x))


def init_noisy_linear(key, in_features, out_features, std_init=0.4):
    k_wmu, k_bmu, k_ein, k_eout, k_beps = jax.random.split(key, 5)
    mu_range = 1.0 / jnp.sqrt(jnp.float32(in_features))

    weight_mu = jax.random.uniform(
        k_wmu, (out_features, in_features), jnp.float32,
        minval=-mu_range, maxval=mu_range)
    weight_sigma = jnp.full((out_features, in_features),
                            std_init / jnp.sqrt(jnp.float32(in_features)),
                            dtype=jnp.float32)
    bias_mu = jax.random.uniform(
        k_bmu, (out_features,), jnp.float32, minval=-mu_range, maxval=mu_range)
    bias_sigma = jnp.full((out_features,),
                          std_init / jnp.sqrt(jnp.float32(out_features)),
                          dtype=jnp.float32)

    # reset_noise(): factored Gaussian noise (kept factored for the kernel;
    # the full outer product is only materialized for the reference check).
    eps_in = _scale_noise(k_ein, in_features)
    eps_out = _scale_noise(k_eout, out_features)
    weight_epsilon = jnp.outer(eps_out, eps_in)
    bias_epsilon = _scale_noise(k_beps, out_features)

    return dict(weight_mu=weight_mu, weight_sigma=weight_sigma,
                eps_in=eps_in, eps_out=eps_out,
                weight_epsilon=weight_epsilon,
                bias_mu=bias_mu, bias_sigma=bias_sigma,
                bias_epsilon=bias_epsilon)


# -----------------------------------------------------------------------------
# Reference (plain JAX) for sanity checks
# -----------------------------------------------------------------------------
def noisy_linear_ref(x, p, training=True):
    if training:
        w = p["weight_mu"] + p["weight_sigma"] * p["weight_epsilon"]
        b = p["bias_mu"] + p["bias_sigma"] * p["bias_epsilon"]
    else:
        w = p["weight_mu"]
        b = p["bias_mu"]
    return x @ w.T + b


def _assert_close(a, b, tol, what):
    err = float(jnp.max(jnp.abs(a - b)) / (jnp.max(jnp.abs(b)) + 1e-6))
    assert err < tol, f"{what}: relative error {err} >= {tol}"


def _prep(params, plan, dtype):
    return prepare_noisy_linear(
        params["weight_mu"], params["weight_sigma"],
        params["eps_in"], params["eps_out"],
        params["bias_mu"], params["bias_sigma"], params["bias_epsilon"],
        plan, compute_dtype=dtype)


if __name__ == "__main__":
    key = jax.random.PRNGKey(0)
    k_p1, k_x1, k_p2, k_x2 = jax.random.split(key, 4)

    # --- Small case (layer sizes like the DQN head) -------------------------
    batch, in_features, out_features = 8, 32, 64
    params = init_noisy_linear(k_p1, in_features, out_features, std_init=0.4)
    x = jax.random.normal(k_x1, (batch, in_features), dtype=jnp.float32)

    plan = make_plan(batch, in_features, out_features)
    prep_f32 = _prep(params, plan, jnp.float32)      # exact-check path
    prep_bf16 = _prep(params, plan, jnp.bfloat16)    # default MXU-input dtype

    fwd_train = jax.jit(lambda xx, pp: noisy_linear_fwd(xx, pp, plan, training=True))
    fwd_eval = jax.jit(lambda xx, pp: noisy_linear_fwd(xx, pp, plan, training=False))

    y = jax.block_until_ready(fwd_train(x, prep_f32))
    y_ref = noisy_linear_ref(x, params, training=True)
    assert y.shape == (batch, out_features)
    assert jnp.allclose(y, y_ref, atol=1e-5, rtol=1e-5), "train f32 mismatch"

    y_bf16 = jax.block_until_ready(fwd_train(x, prep_bf16))
    _assert_close(y_bf16, y_ref, 5e-2, "train bf16 MXU inputs (small)")

    y_eval = jax.block_until_ready(fwd_eval(x, prep_f32))
    assert jnp.allclose(y_eval, noisy_linear_ref(x, params, training=False),
                        atol=1e-5, rtol=1e-5), "eval mismatch"

    # --- Larger case exercising multi-tile N grid + K accumulation ----------
    batch2, in2, out2 = 32, 640, 384
    params2 = init_noisy_linear(k_p2, in2, out2, std_init=0.4)
    x2 = jax.random.normal(k_x2, (batch2, in2), dtype=jnp.float32)

    plan2 = make_plan(batch2, in2, out2)
    prep2_f32 = _prep(params2, plan2, jnp.float32)
    prep2_bf16 = _prep(params2, plan2, jnp.bfloat16)
    fwd2 = jax.jit(lambda xx, pp: noisy_linear_fwd(xx, pp, plan2, training=True))

    y2_ref = noisy_linear_ref(x2, params2, training=True)
    y2 = jax.block_until_ready(fwd2(x2, prep2_f32))
    _assert_close(y2, y2_ref, 1e-3, "train f32 (tiled)")

    y2_bf16 = jax.block_until_ready(fwd2(x2, prep2_bf16))
    _assert_close(y2_bf16, y2_ref, 5e-2, "train bf16 MXU inputs (tiled)")

    print("KERNEL_OK")
</pallas_src>

<mosaic_0001>
module attributes {stable_mosaic.version = 11 : i64} {
  func.func @_noisy_linear_train_kernel(%arg0: i32, %arg1: i32, %arg2: i32, %arg3: memref<8x128xf32, #tpu.memory_space<vmem>>, %arg4: memref<128x128xf32, #tpu.memory_space<vmem>>, %arg5: memref<128x128xf32, #tpu.memory_space<vmem>>, %arg6: memref<1x128xf32, #tpu.memory_space<vmem>>, %arg7: memref<1x128xf32, #tpu.memory_space<vmem>>, %arg8: memref<1x128xf32, #tpu.memory_space<vmem>>, %arg9: memref<8x128xf32, #tpu.memory_space<vmem>>) attributes {dimension_semantics = [#tpu.dimension_semantics<parallel>, #tpu.dimension_semantics<parallel>, #tpu.dimension_semantics<arbitrary>], iteration_bounds = array<i64: 1, 1, 1>, scalar_prefetch = 0 : i64, scratch_operands = 0 : i64, tpu.core_type = #tpu.core_type<tc>, window_params = [{transform_indices = @transform_0, window_bounds = array<i64: 8, 128>}, {transform_indices = @transform_1, window_bounds = array<i64: 128, 128>}, {transform_indices = @transform_2, window_bounds = array<i64: 128, 128>}, {transform_indices = @transform_3, window_bounds = array<i64: 1, 128>}, {transform_indices = @transform_4, window_bounds = array<i64: 1, 128>}, {transform_indices = @transform_5, window_bounds = array<i64: 1, 128>}, {transform_indices = @transform_6, window_bounds = array<i64: 8, 128>}]} {
    %c0_i32 = arith.constant 0 : i32
    %0 = arith.cmpi eq, %arg2, %c0_i32 : i32
    %1 = arith.extui %0 : i1 to i32
    %c0_i32_0 = arith.constant 0 : i32
    %2 = arith.cmpi ne, %1, %c0_i32_0 : i32
    scf.if %2 {
      %c0_15 = arith.constant 0 : index
      %c0_16 = arith.constant 0 : index
      %18 = vector.load %arg8[%c0_15, %c0_16] : memref<1x128xf32, #tpu.memory_space<vmem>>, vector<1x128xf32>
      %19 = vector.shape_cast %18 : vector<1x128xf32> to vector<1x128xf32>
      %20 = vector.broadcast %19 : vector<1x128xf32> to vector<8x128xf32>
      %c0_17 = arith.constant 0 : index
      %c0_18 = arith.constant 0 : index
      %21 = vector.load %arg9[%c0_17, %c0_18] : memref<8x128xf32, #tpu.memory_space<vmem>>, vector<8x128xf32>
      tpu.vector_store %arg9[%c0_17, %c0_18], %20 {strides = array<i32>} : memref<8x128xf32, #tpu.memory_space<vmem>>, vector<8x128xf32>,
    } else {
    }
    %c0 = arith.constant 0 : index
    %c0_1 = arith.constant 0 : index
    %3 = vector.load %arg3[%c0, %c0_1] : memref<8x128xf32, #tpu.memory_space<vmem>>, vector<8x128xf32>
    %c0_2 = arith.constant 0 : index
    %c0_3 = arith.constant 0 : index
    %4 = vector.load %arg6[%c0_2, %c0_3] : memref<1x128xf32, #tpu.memory_space<vmem>>, vector<1x128xf32>
    %5 = vector.broadcast %4 : vector<1x128xf32> to vector<8x128xf32>
    %6 = arith.mulf %3, %5 : vector<8x128xf32>
    %c0_4 = arith.constant 0 : index
    %c0_5 = arith.constant 0 : index
    %7 = vector.load %arg4[%c0_4, %c0_5] : memref<128x128xf32, #tpu.memory_space<vmem>>, vector<128x128xf32>
    %cst = arith.constant dense<0.000000e+00> : vector<8x128xf32>
    %8 = tpu.matmul %3, %7, %cst {dimension_numbers = #tpu.dot_dimension_numbers<[1], [0], [0], [1], [0, 0, 1, 1], [], []>} : vector<8x128xf32>, vector<128x128xf32>, vector<8x128xf32> -> vector<8x128xf32>
    %c0_6 = arith.constant 0 : index
    %c0_7 = arith.constant 0 : index
    %9 = vector.load %arg5[%c0_6, %c0_7] : memref<128x128xf32, #tpu.memory_space<vmem>>, vector<128x128xf32>
    %cst_8 = arith.constant dense<0.000000e+00> : vector<8x128xf32>
    %10 = tpu.matmul %6, %9, %cst_8 {dimension_numbers = #tpu.dot_dimension_numbers<[1], [0], [0], [1], [0, 0, 1, 1], [], []>} : vector<8x128xf32>, vector<128x128xf32>, vector<8x128xf32> -> vector<8x128xf32>
    %c0_9 = arith.constant 0 : index
    %c0_10 = arith.constant 0 : index
    %11 = vector.load %arg9[%c0_9, %c0_10] : memref<8x128xf32, #tpu.memory_space<vmem>>, vector<8x128xf32>
    %c0_11 = arith.constant 0 : index
    %c0_12 = arith.constant 0 : index
    %12 = vector.load %arg7[%c0_11, %c0_12] : memref<1x128xf32, #tpu.memory_space<vmem>>, vector<1x128xf32>
    %13 = vector.broadcast %12 : vector<1x128xf32> to vector<8x128xf32>
    %14 = arith.mulf %13, %10 : vector<8x128xf32>
    %15 = arith.addf %8, %14 : vector<8x128xf32>
    %16 = arith.addf %11, %15 : vector<8x128xf32>
    %c0_13 = arith.constant 0 : index
    %c0_14 = arith.constant 0 : index
    %17 = vector.load %arg9[%c0_13, %c0_14] : memref<8x128xf32, #tpu.memory_space<vmem>>, vector<8x128xf32>
    tpu.vector_store %arg9[%c0_13, %c0_14], %16 {strides = array<i32>} : memref<8x128xf32, #tpu.memory_space<vmem>>, vector<8x128xf32>,
    return
  }
  func.func @transform_0(%arg0: i32, %arg1: i32, %arg2: i32) -> (i32, i32) {
    %c0_i32 = arith.constant 0 : i32
    return %arg0, %arg2 : i32, i32
  }
  func.func @transform_1(%arg0: i32, %arg1: i32, %arg2: i32) -> (i32, i32) {
    %c0_i32 = arith.constant 0 : i32
    return %arg2, %arg1 : i32, i32
  }
  func.func @transform_2(%arg0: i32, %arg1: i32, %arg2: i32) -> (i32, i32) {
    %c0_i32 = arith.constant 0 : i32
    return %arg2, %arg1 : i32, i32
  }
  func.func @transform_3(%arg0: i32, %arg1: i32, %arg2: i32) -> (i32, i32) {
    %c0_i32 = arith.constant 0 : i32
    %c0_i32_0 = arith.constant 0 : i32
    return %c0_i32, %arg2 : i32, i32
  }
  func.func @transform_4(%arg0: i32, %arg1: i32, %arg2: i32) -> (i32, i32) {
    %c0_i32 = arith.constant 0 : i32
    %c0_i32_0 = arith.constant 0 : i32
    return %c0_i32, %arg1 : i32, i32
  }
  func.func @transform_5(%arg0: i32, %arg1: i32, %arg2: i32) -> (i32, i32) {
    %c0_i32 = arith.constant 0 : i32
    %c0_i32_0 = arith.constant 0 : i32
    return %c0_i32, %arg1 : i32, i32
  }
  func.func @transform_6(%arg0: i32, %arg1: i32, %arg2: i32) -> (i32, i32) {
    %c0_i32 = arith.constant 0 : i32
    return %arg0, %arg1 : i32, i32
  }
}

</mosaic_0001>

<llo_original>
// kernel: _lambda_.1
$region0: #{_lambda_.1}
  #allocation0 [shape = 'u32[]', space=smem, size = 0x4, offset = 0x4, fixed_abs, tag = 'smem constant byte address 0x4 - core index']
  #allocation1 [shape = 'u32[144,128]{1,0:T(1,128)}', space=vmem, size = 0x12000, scoped, tag = 'internal scratch']
  %s0 = inlined_call_operand.vmem [shape: f32[8,128], index: 0, kind: input, shape index: {}]
  %s1 = inlined_call_operand.hbm [shape: f32[128,128], index: 1, kind: input, shape index: {}]
  %s2 = inlined_call_operand.hbm [shape: f32[128,128], index: 2, kind: input, shape index: {}]
  %s3 = inlined_call_operand.vmem [shape: f32[1,128], index: 3, kind: input, shape index: {}]
  %s4 = inlined_call_operand.vmem [shape: f32[1,128], index: 4, kind: input, shape index: {}]
  %s5 = inlined_call_operand.vmem [shape: f32[1,128], index: 5, kind: input, shape index: {}]
  %s6 = inlined_call_operand.hbm [shape: f32[8,128], index: 6, kind: output, shape index: {}]
  %s7 = sld [smem:[#allocation0]]
  $region46: #{_lambda_.1} parent=0
    _
  %s9 = ssub.s32 1, %s7
  %s10 = scalar_select 0, %s9, %s7
  $region1: #{_lambda_.1} parent=0
    #allocation2 [shape = 'u8[65536]{0}', space=vmem, size = 0x10000, scoped, tag = 'input window, operand 1, single buffered']
    #allocation3 [shape = 's32[1]{0}', space=sflag, size = 0x4, scoped, tag = 'scoped memory for _lambda_.1']
    #allocation4 [shape = 's32[1]{0}', space=sflag, size = 0x4, scoped, tag = 'scoped memory for _lambda_.1']
    #allocation5 [shape = 'u8[65536]{0}', space=vmem, size = 0x10000, scoped, tag = 'input window, operand 2, single buffered']
    #allocation6 [shape = 's32[1]{0}', space=sflag, size = 0x4, scoped, tag = 'scoped memory for _lambda_.1']
    #allocation7 [shape = 'u8[4096]{0}', space=vmem, size = 0x1000, scoped, tag = 'output window, operand 0, single buffered']
    %11 = vsyncpa [#allocation3], 0
    %12 = vsyncpa [#allocation6], 0
    %13 = vsyncpa [#allocation4], 0
    // Predicated region
    $region2: #{_lambda_.1} parent=1 // pred_check
      _
    $region3: #{_lambda_.1} parent=1 // pred_check_branch
      %15 = sbr.rel (0) target = $region5
    $region4: #{_lambda_.1} parent=1 // pred_region
      _
    $region5: #{_lambda_.1} parent=1 // pred_fallthru
      _
    // Predicated region
    $region6: #{_lambda_.1} parent=1 // pred_check
      _
    $region7: #{_lambda_.1} parent=1 // pred_check_branch
      %17 = sbr.rel (0) target = $region9
    $region8: #{_lambda_.1} parent=1 // pred_region
      %s19 = ssub.s32 2048, 2048
      %20 = vsyncadd [#allocation3], %s19
      %s21 = sshll.u32 [#allocation2], 4
      %s22 = int_to_ptr.vmem [resolvable:$true] %s21
      %27 = dma.hbm_to_vmem [thread:$0]  %s1, 2048, %s22, [#allocation3], 128, 128, 8
    $region9: #{_lambda_.1} parent=1 // pred_fallthru
      _
    // Predicated region
    $region10: #{_lambda_.1} parent=1 // pred_check
      _
    $region11: #{_lambda_.1} parent=1 // pred_check_branch
      %29 = sbr.rel (0) target = $region13
    $region12: #{_lambda_.1} parent=1 // pred_region
      %s31 = ssub.s32 2048, 2048
      %32 = vsyncadd [#allocation6], %s31
      %s33 = sshll.u32 [#allocation5], 4
      %s34 = int_to_ptr.vmem [resolvable:$true] %s33
      %39 = dma.hbm_to_vmem [thread:$0]  %s2, 2048, %s34, [#allocation6], 128, 128, 8
    $region13: #{_lambda_.1} parent=1 // pred_fallthru
      _
    // Predicated region
    $region14: #{_lambda_.1} parent=1 // pred_check
      _
    $region15: #{_lambda_.1} parent=1 // pred_check_branch
      %41 = sbr.rel (0) target = $region17
    $region16: #{_lambda_.1} parent=1 // pred_region
      _
    $region17: #{_lambda_.1} parent=1 // pred_fallthru
      _
    // Predicated region
    $region18: #{_lambda_.1} parent=1 // pred_check
      _
    $region19: #{_lambda_.1} parent=1 // pred_check_branch
      %43 = sbr.rel (0) target = $region21
    $region20: #{_lambda_.1} parent=1 // pred_region
      _
    $region21: #{_lambda_.1} parent=1 // pred_fallthru
      _
    // Predicated region
    $region22: #{_lambda_.1} parent=1 // pred_check
      _
    $region23: #{_lambda_.1} parent=1 // pred_check_branch
      %45 = sbr.rel (0) target = $region25
    $region24: #{_lambda_.1} parent=1 // pred_region
      _
    $region25: #{_lambda_.1} parent=1 // pred_fallthru
      _
    // Predicated region
    $region26: #{_lambda_.1} parent=1 // pred_check
      _
    $region27: #{_lambda_.1} parent=1 // pred_check_branch
      %47 = sbr.rel (0) target = $region29
    $region28: #{_lambda_.1} parent=1 // pred_region
      %48 = dma.done [#allocation3], 2048
    $region29: #{_lambda_.1} parent=1 // pred_fallthru
      _
    // Predicated region
    $region30: #{_lambda_.1} parent=1 // pred_check
      _
    $region31: #{_lambda_.1} parent=1 // pred_check_branch
      %50 = sbr.rel (0) target = $region33
    $region32: #{_lambda_.1} parent=1 // pred_region
      %51 = dma.done [#allocation6], 2048
    $region33: #{_lambda_.1} parent=1 // pred_fallthru
      _
    %p52 = scmp.eq.s32.totalorder 0, 0
    // Predicated region
    $region34: #{_lambda_.1} parent=1 // pred_check
      %p53 = pneg %p52
    $region35: #{_lambda_.1} parent=1 // pred_check_branch
      %55 = sbr.rel (%p53) target = $region37
    $region36: #{_lambda_.1} parent=1 // pred_region
      %v56 = vld [vmem:[%s5] sm:$0x1]
      %v58 = vlaneseq
      %v59 = vshrl.u32 %v58, 7
      %v60 = vsub.s32 0, %v59
      %v61 = vrot.slane %v56, %v60
      %63 = vst [vmem:[#allocation7] sm:$0xff] %v61
    $region37: #{_lambda_.1} parent=1 // pred_fallthru
      _
    %v64 = vld [vmem:[%s0] sm:$0xff]
    %v65 = vld [vmem:[%s3] sm:$0x1]
    %v67 = vlaneseq
    %v68 = vshrl.u32 %v67, 7
    %v69 = vsub.s32 0, %v68
    %v70 = vrot.slane %v65, %v69
    %v72 = vmul.f32 %v64, %v70
    %v73 = vld [vmem:[#allocation2] sm:$0xff]
    %v74 = vld [vmem:[#allocation2 + $0x8] sm:$0xff]
    %v75 = vld [vmem:[#allocation2 + $0x10] sm:$0xff]
    %v76 = vld [vmem:[#allocation2 + $0x18] sm:$0xff]
    %v77 = vld [vmem:[#allocation2 + $0x20] sm:$0xff]
    %v78 = vld [vmem:[#allocation2 + $0x28] sm:$0xff]
    %v79 = vld [vmem:[#allocation2 + $0x30] sm:$0xff]
    %v80 = vld [vmem:[#allocation2 + $0x38] sm:$0xff]
    %v81 = vld [vmem:[#allocation2 + $0x40] sm:$0xff]
    %v82 = vld [vmem:[#allocation2 + $0x48] sm:$0xff]
    %v83 = vld [vmem:[#allocation2 + $0x50] sm:$0xff]
    %v84 = vld [vmem:[#allocation2 + $0x58] sm:$0xff]
    %v85 = vld [vmem:[#allocation2 + $0x60] sm:$0xff]
    %v86 = vld [vmem:[#allocation2 + $0x68] sm:$0xff]
    %v87 = vld [vmem:[#allocation2 + $0x70] sm:$0xff]
    %v88 = vld [vmem:[#allocation2 + $0x78] sm:$0xff]
    %v89 = vld [vmem:[#allocation5] sm:$0xff]
    %v90 = vld [vmem:[#allocation5 + $0x8] sm:$0xff]
    %v91 = vld [vmem:[#allocation5 + $0x10] sm:$0xff]
    %v92 = vld [vmem:[#allocation5 + $0x18] sm:$0xff]
    %v93 = vld [vmem:[#allocation5 + $0x20] sm:$0xff]
    %v94 = vld [vmem:[#allocation5 + $0x28] sm:$0xff]
    %v95 = vld [vmem:[#allocation5 + $0x30] sm:$0xff]
    %v96 = vld [vmem:[#allocation5 + $0x38] sm:$0xff]
    %v97 = vld [vmem:[#allocation5 + $0x40] sm:$0xff]
    %v98 = vld [vmem:[#allocation5 + $0x48] sm:$0xff]
    %v99 = vld [vmem:[#allocation5 + $0x50] sm:$0xff]
    %v100 = vld [vmem:[#allocation5 + $0x58] sm:$0xff]
    %v101 = vld [vmem:[#allocation5 + $0x60] sm:$0xff]
    %v102 = vld [vmem:[#allocation5 + $0x68] sm:$0xff]
    %v103 = vld [vmem:[#allocation5 + $0x70] sm:$0xff]
    %v104 = vld [vmem:[#allocation5 + $0x78] sm:$0xff]
    %105 = vmatprep.subr.mxu0 0.0
    %106 = vmatpush1.msra.mxu0 %v89
    %107 = vmatprep.subr.mxu0 0.0
    %108 = vmatpush1.msra.mxu0 %v90
    %109 = vmatprep.subr.mxu0 0.0
    %110 = vmatpush1.msra.mxu0 %v91
    %111 = vmatprep.subr.mxu0 0.0
    %112 = vmatpush1.msra.mxu0 %v92
    %113 = vmatprep.subr.mxu0 0.0
    %114 = vmatpush1.msra.mxu0 %v93
    %115 = vmatprep.subr.mxu0 0.0
    %116 = vmatpush1.msra.mxu0 %v94
    %117 = vmatprep.subr.mxu0 0.0
    %118 = vmatpush1.msra.mxu0 %v95
    %119 = vmatprep.subr.mxu0 0.0
    %120 = vmatpush1.msra.mxu0 %v96
    %121 = vmatprep.subr.mxu0 0.0
    %122 = vmatpush1.msra.mxu0 %v97
    %123 = vmatprep.subr.mxu0 0.0
    %124 = vmatpush1.msra.mxu0 %v98
    %125 = vmatprep.subr.mxu0 0.0
    %126 = vmatpush1.msra.mxu0 %v99
    %127 = vmatprep.subr.mxu0 0.0
    %128 = vmatpush1.msra.mxu0 %v100
    %129 = vmatprep.subr.mxu0 0.0
    %130 = vmatpush1.msra.mxu0 %v101
    %131 = vmatprep.subr.mxu0 0.0
    %132 = vmatpush1.msra.mxu0 %v102
    %133 = vmatprep.subr.mxu0 0.0
    %134 = vmatpush1.msra.mxu0 %v103
    %135 = vmatprep.subr.mxu0 0.0
    %136 = vmatpush1.msra.mxu0 %v104
    %137 = vmatprep.subr.mxu0 0.0
    %138 = vmatpush1.msra.mxu0 0.0
    %139 = vmatprep.subr.mxu0 0.0
    %140 = vmatpush1.msra.mxu0 0.0
    %141 = vmatprep.subr.mxu0 0.0
    %142 = vmatpush1.msra.mxu0 0.0
    %143 = vmatprep.subr.mxu0 0.0
    %144 = vmatpush1.msra.mxu0 0.0
    %145 = vmatprep.subr.mxu0 0.0
    %146 = vmatpush1.msra.mxu0 0.0
    %147 = vmatprep.subr.mxu0 0.0
    %148 = vmatpush1.msra.mxu0 0.0
    %149 = vmatprep.subr.mxu0 0.0
    %150 = vmatpush1.msra.mxu0 0.0
    %151 = vmatprep.subr.mxu0 0.0
    %152 = vmatpush1.msra.mxu0 0.0
    %153 = vmatprep.subr.mxu0 0.0
    %154 = vmatpush1.msra.mxu0 0.0
    %155 = vmatprep.subr.mxu0 0.0
    %156 = vmatpush1.msra.mxu0 0.0
    %157 = vmatprep.subr.mxu0 0.0
    %158 = vmatpush1.msra.mxu0 0.0
    %159 = vmatprep.subr.mxu0 0.0
    %160 = vmatpush1.msra.mxu0 0.0
    %161 = vmatprep.subr.mxu0 0.0
    %162 = vmatpush1.msra.mxu0 0.0
    %163 = vmatprep.subr.mxu0 0.0
    %164 = vmatpush1.msra.mxu0 0.0
    %165 = vmatprep.subr.mxu0 0.0
    %166 = vmatpush1.msra.mxu0 0.0
    %167 = vmatprep.subr.mxu0 0.0
    %168 = vmatpush1.msra.mxu0 0.0
    %169 = vmatprep.mubr.f32.mxu0 0.0
    %170 = vmatmul.mubr.f32.gmra.mrb[0].mxu0 %v72
    %v171 = vpop.f32.mrb[0].mxu0
    %v172 = vadd.f32 0.0, %v171
    %v173 = vpop.f32.mrb[0].mxu0
    %174 = vdwg.mxu0
    %v175 = vld [vmem:[#allocation7] sm:$0xff]
    %v176 = vld [vmem:[%s4] sm:$0x1]
    %v178 = vlaneseq
    %v179 = vshrl.u32 %v178, 7
    %v180 = vsub.s32 0, %v179
    %v181 = vrot.slane %v176, %v180
    %v183 = vmul.f32 %v181, %v172
    %184 = vmatprep.subr.mxu0 0.0
    %185 = vmatpush1.msra.mxu0 %v73
    %186 = vmatprep.subr.mxu0 0.0
    %187 = vmatpush1.msra.mxu0 %v74
    %188 = vmatprep.subr.mxu0 0.0
    %189 = vmatpush1.msra.mxu0 %v75
    %190 = vmatprep.subr.mxu0 0.0
    %191 = vmatpush1.msra.mxu0 %v76
    %192 = vmatprep.subr.mxu0 0.0
    %193 = vmatpush1.msra.mxu0 %v77
    %194 = vmatprep.subr.mxu0 0.0
    %195 = vmatpush1.msra.mxu0 %v78
    %196 = vmatprep.subr.mxu0 0.0
    %197 = vmatpush1.msra.mxu0 %v79
    %198 = vmatprep.subr.mxu0 0.0
    %199 = vmatpush1.msra.mxu0 %v80
    %200 = vmatprep.subr.mxu0 0.0
    %201 = vmatpush1.msra.mxu0 %v81
    %202 = vmatprep.subr.mxu0 0.0
    %203 = vmatpush1.msra.mxu0 %v82
    %204 = vmatprep.subr.mxu0 0.0
    %205 = vmatpush1.msra.mxu0 %v83
    %206 = vmatprep.subr.mxu0 0.0
    %207 = vmatpush1.msra.mxu0 %v84
    %208 = vmatprep.subr.mxu0 0.0
    %209 = vmatpush1.msra.mxu0 %v85
    %210 = vmatprep.subr.mxu0 0.0
    %211 = vmatpush1.msra.mxu0 %v86
    %212 = vmatprep.subr.mxu0 0.0
    %213 = vmatpush1.msra.mxu0 %v87
    %214 = vmatprep.subr.mxu0 0.0
    %215 = vmatpush1.msra.mxu0 %v88
    %216 = vmatprep.subr.mxu0 0.0
    %217 = vmatpush1.msra.mxu0 0.0
    %218 = vmatprep.subr.mxu0 0.0
    %219 = vmatpush1.msra.mxu0 0.0
    %220 = vmatprep.subr.mxu0 0.0
    %221 = vmatpush1.msra.mxu0 0.0
    %222 = vmatprep.subr.mxu0 0.0
    %223 = vmatpush1.msra.mxu0 0.0
    %224 = vmatprep.subr.mxu0 0.0
    %225 = vmatpush1.msra.mxu0 0.0
    %226 = vmatprep.subr.mxu0 0.0
    %227 = vmatpush1.msra.mxu0 0.0
    %228 = vmatprep.subr.mxu0 0.0
    %229 = vmatpush1.msra.mxu0 0.0
    %230 = vmatprep.subr.mxu0 0.0
    %231 = vmatpush1.msra.mxu0 0.0
    %232 = vmatprep.subr.mxu0 0.0
    %233 = vmatpush1.msra.mxu0 0.0
    %234 = vmatprep.subr.mxu0 0.0
    %235 = vmatpush1.msra.mxu0 0.0
    %236 = vmatprep.subr.mxu0 0.0
    %237 = vmatpush1.msra.mxu0 0.0
    %238 = vmatprep.subr.mxu0 0.0
    %239 = vmatpush1.msra.mxu0 0.0
    %240 = vmatprep.subr.mxu0 0.0
    %241 = vmatpush1.msra.mxu0 0.0
    %242 = vmatprep.subr.mxu0 0.0
    %243 = vmatpush1.msra.mxu0 0.0
    %244 = vmatprep.subr.mxu0 0.0
    %245 = vmatpush1.msra.mxu0 0.0
    %246 = vmatprep.subr.mxu0 0.0
    %247 = vmatpush1.msra.mxu0 0.0
    %248 = vmatprep.mubr.f32.mxu0 0.0
    %249 = vmatmul.mubr.f32.gmra.mrb[0].mxu0 %v64
    %v250 = vpop.f32.mrb[0].mxu0
    %v251 = vadd.f32 %v183, %v250
    %v252 = vpop.f32.mrb[0].mxu0
    %253 = vdwg.mxu0
    %v254 = vadd.f32 %v175, %v251
    %255 = vst [vmem:[#allocation7] sm:$0xff] %v254
    // Predicated region
    $region38: #{_lambda_.1} parent=1 // pred_check
      _
    $region39: #{_lambda_.1} parent=1 // pred_check_branch
      %257 = sbr.rel (0) target = $region41
    $region40: #{_lambda_.1} parent=1 // pred_region
      %s259 = ssub.s32 128, 128
      %260 = vsyncadd [#allocation4], %s259
      %s262 = sshll.u32 [#allocation7], 4
      %s263 = int_to_ptr.vmem [resolvable:$true] %s262
      %265 = dma.vmem_to_hbm [thread:$0]  %s263, 128, %s6, [#allocation4]
    $region41: #{_lambda_.1} parent=1 // pred_fallthru
      _
    // Predicated region
    $region42: #{_lambda_.1} parent=1 // pred_check
      _
    $region43: #{_lambda_.1} parent=1 // pred_check_branch
      %267 = sbr.rel (0) target = $region45
    $region44: #{_lambda_.1} parent=1 // pred_region
      %268 = dma.done [#allocation4], 128
    $region45: #{_lambda_.1} parent=1 // pred_fallthru
      _
    %269 = vsyncpa [#allocation3], 1
    %270 = vsyncpa [#allocation6], 1
    %271 = vsyncpa [#allocation4], 1

</llo_original>
